<compile_context>
chip_gen: v7x
topology: tpu7x:2x2x1
jax: 0.10.0
libtpu: 0.0.40
codegen_flags: <defaults>
</compile_context>

<pallas_src>
import jax
import jax.numpy as jnp
from jax.experimental import pallas as pl
from jax.experimental.pallas import tpu as pltpu

IN_F = 4      # iris input features
HID_F = 10    # hidden features
OUT_F = 3     # classes
HPAD = 128    # hidden dim padded to a full lane register (MXU / VPU friendly)
OPAD = 8      # output dim padded to one sublane group (16x less write traffic)


def _round_up(n, m):
    return ((n + m - 1) // m) * m


def _choose_tile(bp):
    # Tile must be a multiple of 128 (lane-dense (8, tb) output blocks).
    # 128 keeps >= 2 grid steps whenever bp >= 256 (v7x megacore + pipelining);
    # 256 for very large batches limits per-step overhead while keeping the
    # f32 intermediate h = (128, tb) small enough to avoid heavy vreg spills
    # on v5e.
    return 128 if bp <= 2048 else 256


def irisnet_kernel(xt_ref, w1_ref, b1_ref, w2_ref, b2_ref, out_ref):
    # xt:  (IN_F, tb)  bf16    w1: (HPAD, IN_F) bf16    b1: (HPAD, 1) f32
    # w2:  (OPAD, HPAD) bf16   b2: (OPAD, 1) f32        out: (OPAD, tb) f32
    xt = xt_ref[...].astype(jnp.float32)      # (4, tb)
    w1 = w1_ref[...].astype(jnp.float32)      # (128, 4)

    # fc1: K=4 -> 4 broadcast-FMAs on the VPU (an MXU matmul would be >99%
    # zero padding).  w1 columns broadcast along lanes and are reused across
    # the whole batch tile.  Padded hidden rows of w1/b1 are zero, so h's
    # padded rows are zero and ReLU keeps them zero.
    h = b1_ref[...]                                        # (128, 1), broadcasts
    for k in range(w1_ref.shape[1]):                       # static 4-iter unroll
        h = h + w1[:, k:k + 1] * xt[k:k + 1, :]            # (128, tb)
    h = jnp.maximum(h, 0.0)                                # ReLU

    # fc2 on the MXU: (OPAD, HPAD) @ (HPAD, tb), bf16 operands, f32 accumulate.
    # Padded hidden columns of w2 multiply zero rows of h; padded output rows
    # of w2/b2 are zero and get sliced off in the wrapper.
    y = jnp.dot(w2_ref[...], h.astype(jnp.bfloat16),
                preferred_element_type=jnp.float32)        # (8, tb)
    out_ref[...] = (y + b2_ref[...]).astype(out_ref.dtype)


def prepare_params(w1, b1, w2, b2):
    """Pad/cast PyTorch-layout params once (hoisted out of the forward call).

    w1: (10, 4), b1: (10,), w2: (3, 10), b2: (3,)  (nn.Linear layout).
    """
    w1p = jnp.zeros((HPAD, IN_F), jnp.bfloat16).at[:HID_F, :].set(
        w1.astype(jnp.bfloat16))
    b1p = jnp.zeros((HPAD, 1), jnp.float32).at[:HID_F, 0].set(
        b1.reshape(HID_F).astype(jnp.float32))
    w2p = jnp.zeros((OPAD, HPAD), jnp.bfloat16).at[:OUT_F, :HID_F].set(
        w2.astype(jnp.bfloat16))
    b2p = jnp.zeros((OPAD, 1), jnp.float32).at[:OUT_F, 0].set(
        b2.reshape(OUT_F).astype(jnp.float32))
    return w1p, b1p, w2p, b2p


def irisnet_forward(x, w1p, b1p, w2p, b2p):
    """x: (B, 4) f32; padded params from prepare_params().  Returns (B, 3) f32."""
    B = x.shape[0]

    bp = _round_up(B, 128)
    tb = _choose_tile(bp)
    bp = _round_up(bp, tb)
    grid = (bp // tb,)

    # Feature-major input: (4, bp) bf16, batch on the lane axis, zero-padded.
    xtp = jnp.zeros((IN_F, bp), jnp.bfloat16).at[:, :B].set(
        x.astype(jnp.bfloat16).T)

    cost = pl.CostEstimate(
        flops=2 * bp * (IN_F * HPAD + HPAD * OPAD),
        transcendentals=0,
        bytes_accessed=(IN_F * bp * 2            # xT (bf16)
                        + OPAD * bp * 4          # yT (f32)
                        + HPAD * IN_F * 2 + HPAD * 4      # w1, b1
                        + OPAD * HPAD * 2 + OPAD * 4),    # w2, b2
    )

    out_t = pl.pallas_call(
        irisnet_kernel,
        out_shape=jax.ShapeDtypeStruct((OPAD, bp), jnp.float32),
        grid=grid,
        in_specs=[
            pl.BlockSpec((IN_F, tb), lambda i: (0, i)),     # xT tile per step
            pl.BlockSpec((HPAD, IN_F), lambda i: (0, 0)),   # w1: VMEM-resident
            pl.BlockSpec((HPAD, 1), lambda i: (0, 0)),      # b1: VMEM-resident
            pl.BlockSpec((OPAD, HPAD), lambda i: (0, 0)),   # w2: VMEM-resident
            pl.BlockSpec((OPAD, 1), lambda i: (0, 0)),      # b2: VMEM-resident
        ],
        out_specs=pl.BlockSpec((OPAD, tb), lambda i: (0, i)),  # lane-dense store
        compiler_params=pltpu.CompilerParams(
            dimension_semantics=("parallel",)),             # 2 TCs on v7x
        cost_estimate=cost,
    )(xtp, w1p, b1p, w2p, b2p)

    return out_t[:OUT_F, :B].T


def init_params(key):
    # Deterministic init mimicking nn.Linear's uniform(-1/sqrt(fan_in), +...).
    k1, k2, k3, k4 = jax.random.split(key, 4)
    bound1 = 1.0 / jnp.sqrt(float(IN_F))
    bound2 = 1.0 / jnp.sqrt(float(HID_F))
    w1 = jax.random.uniform(k1, (HID_F, IN_F), jnp.float32, -bound1, bound1)
    b1 = jax.random.uniform(k2, (HID_F,), jnp.float32, -bound1, bound1)
    w2 = jax.random.uniform(k3, (OUT_F, HID_F), jnp.float32, -bound2, bound2)
    b2 = jax.random.uniform(k4, (OUT_F,), jnp.float32, -bound2, bound2)
    return w1, b1, w2, b2


if __name__ == "__main__":
    key = jax.random.PRNGKey(0)
    kx, kp = jax.random.split(key)

    batch = 8
    x = jax.random.normal(kx, (batch, IN_F), jnp.float32)
    w1, b1, w2, b2 = init_params(kp)

    # Parameter padding/casting done once, outside the forward call.
    w1p, b1p, w2p, b2p = prepare_params(w1, b1, w2, b2)

    fwd = jax.jit(irisnet_forward)
    out = fwd(x, w1p, b1p, w2p, b2p)
    out = jax.block_until_ready(out)
    assert out.shape == (batch, OUT_F)

    # Reference in plain JAX (PyTorch semantics y = relu(x W1^T + b1) W2^T + b2),
    # mirroring the kernel's bf16 I/O with f32 accumulation.
    xq = x.astype(jnp.bfloat16).astype(jnp.float32)
    w1q = w1.astype(jnp.bfloat16).astype(jnp.float32)
    w2q = w2.astype(jnp.bfloat16).astype(jnp.float32)
    h_ref = jnp.maximum(xq @ w1q.T + b1[None, :], 0.0)
    ref = h_ref.astype(jnp.bfloat16).astype(jnp.float32) @ w2q.T + b2[None, :]
    assert jnp.allclose(out, ref, atol=1e-2, rtol=1e-2), (
        f"max abs err {jnp.max(jnp.abs(out - ref))}")

    print("KERNEL_OK")
</pallas_src>

<mosaic_0001>
module attributes {stable_mosaic.version = 11 : i64} {
  func.func @irisnet_kernel(%arg0: i32, %arg1: memref<4x128xbf16, #tpu.memory_space<vmem>>, %arg2: memref<128x4xbf16, #tpu.memory_space<vmem>>, %arg3: memref<128x1xf32, #tpu.memory_space<vmem>>, %arg4: memref<8x128xbf16, #tpu.memory_space<vmem>>, %arg5: memref<8x1xf32, #tpu.memory_space<vmem>>, %arg6: memref<8x128xf32, #tpu.memory_space<vmem>>) attributes {dimension_semantics = [#tpu.dimension_semantics<parallel>], iteration_bounds = array<i64: 1>, scalar_prefetch = 0 : i64, scratch_operands = 0 : i64, tpu.core_type = #tpu.core_type<tc>, window_params = [{transform_indices = @transform_0, window_bounds = array<i64: 4, 128>}, {pipeline_mode = #tpu.pipeline_mode<synchronous>, transform_indices = @transform_1, window_bounds = array<i64: 128, 4>}, {pipeline_mode = #tpu.pipeline_mode<synchronous>, transform_indices = @transform_2, window_bounds = array<i64: 128, 1>}, {pipeline_mode = #tpu.pipeline_mode<synchronous>, transform_indices = @transform_3, window_bounds = array<i64: 8, 128>}, {pipeline_mode = #tpu.pipeline_mode<synchronous>, transform_indices = @transform_4, window_bounds = array<i64: 8, 1>}, {transform_indices = @transform_5, window_bounds = array<i64: 8, 128>}]} {
    %c0 = arith.constant 0 : index
    %c0_0 = arith.constant 0 : index
    %0 = vector.load %arg1[%c0, %c0_0] : memref<4x128xbf16, #tpu.memory_space<vmem>>, vector<4x128xbf16>
    %1 = arith.extf %0 : vector<4x128xbf16> to vector<4x128xf32>
    %c0_1 = arith.constant 0 : index
    %c0_2 = arith.constant 0 : index
    %2 = vector.load %arg2[%c0_1, %c0_2] : memref<128x4xbf16, #tpu.memory_space<vmem>>, vector<128x4xbf16>
    %3 = arith.extf %2 : vector<128x4xbf16> to vector<128x4xf32>
    %c0_3 = arith.constant 0 : index
    %c0_4 = arith.constant 0 : index
    %4 = vector.load %arg3[%c0_3, %c0_4] : memref<128x1xf32, #tpu.memory_space<vmem>>, vector<128x1xf32>
    %5 = vector.extract_strided_slice %3 {offsets = [0, 0], sizes = [128, 1], strides = [1, 1]} : vector<128x4xf32> to vector<128x1xf32>
    %6 = vector.extract_strided_slice %1 {offsets = [0, 0], sizes = [1, 128], strides = [1, 1]} : vector<4x128xf32> to vector<1x128xf32>
    %7 = vector.broadcast %5 : vector<128x1xf32> to vector<128x128xf32>
    %8 = vector.broadcast %6 : vector<1x128xf32> to vector<128x128xf32>
    %9 = arith.mulf %7, %8 : vector<128x128xf32>
    %10 = vector.broadcast %4 : vector<128x1xf32> to vector<128x128xf32>
    %11 = arith.addf %10, %9 : vector<128x128xf32>
    %12 = vector.extract_strided_slice %3 {offsets = [0, 1], sizes = [128, 1], strides = [1, 1]} : vector<128x4xf32> to vector<128x1xf32>
    %13 = vector.extract_strided_slice %1 {offsets = [1, 0], sizes = [1, 128], strides = [1, 1]} : vector<4x128xf32> to vector<1x128xf32>
    %14 = vector.broadcast %12 : vector<128x1xf32> to vector<128x128xf32>
    %15 = vector.broadcast %13 : vector<1x128xf32> to vector<128x128xf32>
    %16 = arith.mulf %14, %15 : vector<128x128xf32>
    %17 = arith.addf %11, %16 : vector<128x128xf32>
    %18 = vector.extract_strided_slice %3 {offsets = [0, 2], sizes = [128, 1], strides = [1, 1]} : vector<128x4xf32> to vector<128x1xf32>
    %19 = vector.extract_strided_slice %1 {offsets = [2, 0], sizes = [1, 128], strides = [1, 1]} : vector<4x128xf32> to vector<1x128xf32>
    %20 = vector.broadcast %18 : vector<128x1xf32> to vector<128x128xf32>
    %21 = vector.broadcast %19 : vector<1x128xf32> to vector<128x128xf32>
    %22 = arith.mulf %20, %21 : vector<128x128xf32>
    %23 = arith.addf %17, %22 : vector<128x128xf32>
    %24 = vector.extract_strided_slice %3 {offsets = [0, 3], sizes = [128, 1], strides = [1, 1]} : vector<128x4xf32> to vector<128x1xf32>
    %25 = vector.extract_strided_slice %1 {offsets = [3, 0], sizes = [1, 128], strides = [1, 1]} : vector<4x128xf32> to vector<1x128xf32>
    %26 = vector.broadcast %24 : vector<128x1xf32> to vector<128x128xf32>
    %27 = vector.broadcast %25 : vector<1x128xf32> to vector<128x128xf32>
    %28 = arith.mulf %26, %27 : vector<128x128xf32>
    %29 = arith.addf %23, %28 : vector<128x128xf32>
    %cst = arith.constant 0.000000e+00 : f32
    %30 = vector.broadcast %cst : f32 to vector<128x128xf32>
    %31 = arith.maximumf %29, %30 : vector<128x128xf32>
    %c0_5 = arith.constant 0 : index
    %c0_6 = arith.constant 0 : index
    %32 = vector.load %arg4[%c0_5, %c0_6] : memref<8x128xbf16, #tpu.memory_space<vmem>>, vector<8x128xbf16>
    %33 = arith.truncf %31 : vector<128x128xf32> to vector<128x128xbf16>
    %cst_7 = arith.constant dense<0.000000e+00> : vector<8x128xf32>
    %34 = tpu.matmul %32, %33, %cst_7 {dimension_numbers = #tpu.dot_dimension_numbers<[1], [0], [0], [1], [0, 0, 1, 1], [], []>} : vector<8x128xbf16>, vector<128x128xbf16>, vector<8x128xf32> -> vector<8x128xf32>
    %c0_8 = arith.constant 0 : index
    %c0_9 = arith.constant 0 : index
    %35 = vector.load %arg5[%c0_8, %c0_9] : memref<8x1xf32, #tpu.memory_space<vmem>>, vector<8x1xf32>
    %36 = vector.broadcast %35 : vector<8x1xf32> to vector<8x128xf32>
    %37 = arith.addf %34, %36 : vector<8x128xf32>
    %c0_10 = arith.constant 0 : index
    %c0_11 = arith.constant 0 : index
    %38 = vector.load %arg6[%c0_10, %c0_11] : memref<8x128xf32, #tpu.memory_space<vmem>>, vector<8x128xf32>
    tpu.vector_store %arg6[%c0_10, %c0_11], %37 {strides = array<i32>} : memref<8x128xf32, #tpu.memory_space<vmem>>, vector<8x128xf32>,
    return
  }
  func.func @transform_0(%arg0: i32) -> (i32, i32) {
    %c0_i32 = arith.constant 0 : i32
    %c0_i32_0 = arith.constant 0 : i32
    return %c0_i32, %arg0 : i32, i32
  }
  func.func @transform_1(%arg0: i32) -> (i32, i32) {
    %c0_i32 = arith.constant 0 : i32
    %c0_i32_0 = arith.constant 0 : i32
    %c0_i32_1 = arith.constant 0 : i32
    return %c0_i32, %c0_i32_0 : i32, i32
  }
  func.func @transform_2(%arg0: i32) -> (i32, i32) {
    %c0_i32 = arith.constant 0 : i32
    %c0_i32_0 = arith.constant 0 : i32
    %c0_i32_1 = arith.constant 0 : i32
    return %c0_i32, %c0_i32_0 : i32, i32
  }
  func.func @transform_3(%arg0: i32) -> (i32, i32) {
    %c0_i32 = arith.constant 0 : i32
    %c0_i32_0 = arith.constant 0 : i32
    %c0_i32_1 = arith.constant 0 : i32
    return %c0_i32, %c0_i32_0 : i32, i32
  }
  func.func @transform_4(%arg0: i32) -> (i32, i32) {
    %c0_i32 = arith.constant 0 : i32
    %c0_i32_0 = arith.constant 0 : i32
    %c0_i32_1 = arith.constant 0 : i32
    return %c0_i32, %c0_i32_0 : i32, i32
  }
  func.func @transform_5(%arg0: i32) -> (i32, i32) {
    %c0_i32 = arith.constant 0 : i32
    %c0_i32_0 = arith.constant 0 : i32
    return %c0_i32, %arg0 : i32, i32
  }
}

</mosaic_0001>

<llo_original>
// kernel: irisnet_forward.1
$region0: #{irisnet_forward.1}
  #allocation0 [shape = 'u32[]', space=smem, size = 0x4, offset = 0x4, fixed_abs, tag = 'smem constant byte address 0x4 - core index']
  #allocation1 [shape = 'u32[144,128]{1,0:T(1,128)}', space=vmem, size = 0x12000, scoped, tag = 'internal scratch']
  %s0 = inlined_call_operand.vmem [shape: bf16[4,128], index: 0, kind: input, shape index: {}]
  %s1 = inlined_call_operand.vmem [shape: bf16[128,4], index: 1, kind: input, shape index: {}]
  %s2 = inlined_call_operand.vmem [shape: f32[128,1], index: 2, kind: input, shape index: {}]
  %s3 = inlined_call_operand.vmem [shape: bf16[8,128], index: 3, kind: input, shape index: {}]
  %s4 = inlined_call_operand.vmem [shape: f32[8,1], index: 4, kind: input, shape index: {}]
  %s5 = inlined_call_operand.vmem [shape: f32[8,128], index: 5, kind: output, shape index: {}]
  %s6 = sld [smem:[#allocation0]]
  $region30: #{irisnet_forward.1} parent=0
    _
  %s8 = ssub.s32 1, %s6
  %s9 = scalar_select 0, %s8, %s6
  // Predicated region
  $region2: #{irisnet_forward.1} parent=0 // pred_check
    _
  $region3: #{irisnet_forward.1} parent=0 // pred_check_branch
    %11 = sbr.rel (0) target = $region5
  $region4: #{irisnet_forward.1} parent=0 // pred_region
    _
  $region5: #{irisnet_forward.1} parent=0 // pred_fallthru
    _
  // Predicated region
  $region6: #{irisnet_forward.1} parent=0 // pred_check
    _
  $region7: #{irisnet_forward.1} parent=0 // pred_check_branch
    %13 = sbr.rel (0) target = $region9
  $region8: #{irisnet_forward.1} parent=0 // pred_region
    _
  $region9: #{irisnet_forward.1} parent=0 // pred_fallthru
    _
  // Predicated region
  $region10: #{irisnet_forward.1} parent=0 // pred_check
    _
  $region11: #{irisnet_forward.1} parent=0 // pred_check_branch
    %15 = sbr.rel (0) target = $region13
  $region12: #{irisnet_forward.1} parent=0 // pred_region
    _
  $region13: #{irisnet_forward.1} parent=0 // pred_fallthru
    _
  // Predicated region
  $region14: #{irisnet_forward.1} parent=0 // pred_check
    _
  $region15: #{irisnet_forward.1} parent=0 // pred_check_branch
    %17 = sbr.rel (0) target = $region17
  $region16: #{irisnet_forward.1} parent=0 // pred_region
    _
  $region17: #{irisnet_forward.1} parent=0 // pred_fallthru
    _
  // Predicated region
  $region18: #{irisnet_forward.1} parent=0 // pred_check
    _
  $region19: #{irisnet_forward.1} parent=0 // pred_check_branch
    %19 = sbr.rel (0) target = $region21
  $region20: #{irisnet_forward.1} parent=0 // pred_region
    _
  $region21: #{irisnet_forward.1} parent=0 // pred_fallthru
    _
  %v21 = vld [vmem:[%s0] sm:$0x3]
  %v22 = vunpack.c.l.bf16 %v21
  %v23 = vld [vmem:[%s1] sm:$0xf]
  %v24 = vld [vmem:[%s1 + $0x4] sm:$0xf]
  %v25 = vld [vmem:[%s1 + $0x8] sm:$0xf]
  %v26 = vld [vmem:[%s1 + $0xc] sm:$0xf]
  %v27 = vld [vmem:[%s1 + $0x10] sm:$0xf]
  %v28 = vld [vmem:[%s1 + $0x14] sm:$0xf]
  %v29 = vld [vmem:[%s1 + $0x18] sm:$0xf]
  %v30 = vld [vmem:[%s1 + $0x1c] sm:$0xf]
  %v31 = vld [vmem:[%s1 + $0x20] sm:$0xf]
  %v32 = vld [vmem:[%s1 + $0x24] sm:$0xf]
  %v33 = vld [vmem:[%s1 + $0x28] sm:$0xf]
  %v34 = vld [vmem:[%s1 + $0x2c] sm:$0xf]
  %v35 = vld [vmem:[%s1 + $0x30] sm:$0xf]
  %v36 = vld [vmem:[%s1 + $0x34] sm:$0xf]
  %v37 = vld [vmem:[%s1 + $0x38] sm:$0xf]
  %v38 = vld [vmem:[%s1 + $0x3c] sm:$0xf]
  %v39 = vunpack.c.l.bf16 %v23
  %v40 = vunpack.c.l.bf16 %v24
  %v41 = vunpack.c.l.bf16 %v25
  %v42 = vunpack.c.l.bf16 %v26
  %v43 = vunpack.c.l.bf16 %v27
  %v44 = vunpack.c.l.bf16 %v28
  %v45 = vunpack.c.l.bf16 %v29
  %v46 = vunpack.c.l.bf16 %v30
  %v47 = vunpack.c.l.bf16 %v31
  %v48 = vunpack.c.l.bf16 %v32
  %v49 = vunpack.c.l.bf16 %v33
  %v50 = vunpack.c.l.bf16 %v34
  %v51 = vunpack.c.l.bf16 %v35
  %v52 = vunpack.c.l.bf16 %v36
  %v53 = vunpack.c.l.bf16 %v37
  %v54 = vunpack.c.l.bf16 %v38
  %v55 = vld [vmem:[%s2] sm:$0xff]
  %v56 = vld [vmem:[%s2 + $0x8] sm:$0xff]
  %v57 = vld [vmem:[%s2 + $0x10] sm:$0xff]
  %v58 = vld [vmem:[%s2 + $0x18] sm:$0xff]
  %v59 = vld [vmem:[%s2 + $0x20] sm:$0xff]
  %v60 = vld [vmem:[%s2 + $0x28] sm:$0xff]
  %v61 = vld [vmem:[%s2 + $0x30] sm:$0xff]
  %v62 = vld [vmem:[%s2 + $0x38] sm:$0xff]
  %v63 = vld [vmem:[%s2 + $0x40] sm:$0xff]
  %v64 = vld [vmem:[%s2 + $0x48] sm:$0xff]
  %v65 = vld [vmem:[%s2 + $0x50] sm:$0xff]
  %v66 = vld [vmem:[%s2 + $0x58] sm:$0xff]
  %v67 = vld [vmem:[%s2 + $0x60] sm:$0xff]
  %v68 = vld [vmem:[%s2 + $0x68] sm:$0xff]
  %v69 = vld [vmem:[%s2 + $0x70] sm:$0xff]
  %v70 = vld [vmem:[%s2 + $0x78] sm:$0xff]
  %72 = vset.pattern.permute.xlu0 0
  %73 = vperm.xlu0 %72, %v39
  %v74 = vpop.permute.xlu0 %73
  %77 = vset.pattern.permute.xlu0 0
  %78 = vperm.xlu0 %77, %v40
  %v79 = vpop.permute.xlu0 %78
  %82 = vset.pattern.permute.xlu0 0
  %83 = vperm.xlu0 %82, %v41
  %v84 = vpop.permute.xlu0 %83
  %87 = vset.pattern.permute.xlu0 0
  %88 = vperm.xlu0 %87, %v42
  %v89 = vpop.permute.xlu0 %88
  %92 = vset.pattern.permute.xlu0 0
  %93 = vperm.xlu0 %92, %v43
  %v94 = vpop.permute.xlu0 %93
  %97 = vset.pattern.permute.xlu0 0
  %98 = vperm.xlu0 %97, %v44
  %v99 = vpop.permute.xlu0 %98
  %102 = vset.pattern.permute.xlu0 0
  %103 = vperm.xlu0 %102, %v45
  %v104 = vpop.permute.xlu0 %103
  %107 = vset.pattern.permute.xlu0 0
  %108 = vperm.xlu0 %107, %v46
  %v109 = vpop.permute.xlu0 %108
  %112 = vset.pattern.permute.xlu0 0
  %113 = vperm.xlu0 %112, %v47
  %v114 = vpop.permute.xlu0 %113
  %117 = vset.pattern.permute.xlu0 0
  %118 = vperm.xlu0 %117, %v48
  %v119 = vpop.permute.xlu0 %118
  %122 = vset.pattern.permute.xlu0 0
  %123 = vperm.xlu0 %122, %v49
  %v124 = vpop.permute.xlu0 %123
  %127 = vset.pattern.permute.xlu0 0
  %128 = vperm.xlu0 %127, %v50
  %v129 = vpop.permute.xlu0 %128
  %132 = vset.pattern.permute.xlu0 0
  %133 = vperm.xlu0 %132, %v51
  %v134 = vpop.permute.xlu0 %133
  %137 = vset.pattern.permute.xlu0 0
  %138 = vperm.xlu0 %137, %v52
  %v139 = vpop.permute.xlu0 %138
  %142 = vset.pattern.permute.xlu0 0
  %143 = vperm.xlu0 %142, %v53
  %v144 = vpop.permute.xlu0 %143
  %147 = vset.pattern.permute.xlu0 0
  %148 = vperm.xlu0 %147, %v54
  %v149 = vpop.permute.xlu0 %148
  %v151 = vlaneseq
  %v152 = vshrl.u32 %v151, 7
  %v153 = vsub.s32 0, %v152
  %v154 = vrot.slane %v22, %v153
  %v155 = vmul.f32 %v74, %v154
  %v156 = vmul.f32 %v79, %v154
  %v157 = vmul.f32 %v84, %v154
  %v158 = vmul.f32 %v89, %v154
  %v159 = vmul.f32 %v94, %v154
  %v160 = vmul.f32 %v99, %v154
  %v161 = vmul.f32 %v104, %v154
  %v162 = vmul.f32 %v109, %v154
  %v163 = vmul.f32 %v114, %v154
  %v164 = vmul.f32 %v119, %v154
  %v165 = vmul.f32 %v124, %v154
  %v166 = vmul.f32 %v129, %v154
  %v167 = vmul.f32 %v134, %v154
  %v168 = vmul.f32 %v139, %v154
  %v169 = vmul.f32 %v144, %v154
  %v170 = vmul.f32 %v149, %v154
  %172 = vset.pattern.permute.xlu0 0
  %173 = vperm.xlu0 %172, %v55
  %v174 = vpop.permute.xlu0 %173
  %177 = vset.pattern.permute.xlu0 0
  %178 = vperm.xlu0 %177, %v56
  %v179 = vpop.permute.xlu0 %178
  %182 = vset.pattern.permute.xlu0 0
  %183 = vperm.xlu0 %182, %v57
  %v184 = vpop.permute.xlu0 %183
  %187 = vset.pattern.permute.xlu0 0
  %188 = vperm.xlu0 %187, %v58
  %v189 = vpop.permute.xlu0 %188
  %192 = vset.pattern.permute.xlu0 0
  %193 = vperm.xlu0 %192, %v59
  %v194 = vpop.permute.xlu0 %193
  %197 = vset.pattern.permute.xlu0 0
  %198 = vperm.xlu0 %197, %v60
  %v199 = vpop.permute.xlu0 %198
  %202 = vset.pattern.permute.xlu0 0
  %203 = vperm.xlu0 %202, %v61
  %v204 = vpop.permute.xlu0 %203
  %207 = vset.pattern.permute.xlu0 0
  %208 = vperm.xlu0 %207, %v62
  %v209 = vpop.permute.xlu0 %208
  %212 = vset.pattern.permute.xlu0 0
  %213 = vperm.xlu0 %212, %v63
  %v214 = vpop.permute.xlu0 %213
  %217 = vset.pattern.permute.xlu0 0
  %218 = vperm.xlu0 %217, %v64
  %v219 = vpop.permute.xlu0 %218
  %222 = vset.pattern.permute.xlu0 0
  %223 = vperm.xlu0 %222, %v65
  %v224 = vpop.permute.xlu0 %223
  %227 = vset.pattern.permute.xlu0 0
  %228 = vperm.xlu0 %227, %v66
  %v229 = vpop.permute.xlu0 %228
  %232 = vset.pattern.permute.xlu0 0
  %233 = vperm.xlu0 %232, %v67
  %v234 = vpop.permute.xlu0 %233
  %237 = vset.pattern.permute.xlu0 0
  %238 = vperm.xlu0 %237, %v68
  %v239 = vpop.permute.xlu0 %238
  %242 = vset.pattern.permute.xlu0 0
  %243 = vperm.xlu0 %242, %v69
  %v244 = vpop.permute.xlu0 %243
  %247 = vset.pattern.permute.xlu0 0
  %248 = vperm.xlu0 %247, %v70
  %v249 = vpop.permute.xlu0 %248
  %v251 = vadd.f32 %v174, %v155
  %v252 = vadd.f32 %v179, %v156
  %v253 = vadd.f32 %v184, %v157
  %v254 = vadd.f32 %v189, %v158
  %v255 = vadd.f32 %v194, %v159
  %v256 = vadd.f32 %v199, %v160
  %v257 = vadd.f32 %v204, %v161
  %v258 = vadd.f32 %v209, %v162
  %v259 = vadd.f32 %v214, %v163
  %v260 = vadd.f32 %v219, %v164
  %v261 = vadd.f32 %v224, %v165
  %v262 = vadd.f32 %v229, %v166
  %v263 = vadd.f32 %v234, %v167
  %v264 = vadd.f32 %v239, %v168
  %v265 = vadd.f32 %v244, %v169
  %v266 = vadd.f32 %v249, %v170
  %267 = vset.pattern.permute.xlu0 1
  %268 = vperm.xlu0 %267, %v39
  %v269 = vpop.permute.xlu0 %268
  %271 = vset.pattern.permute.xlu0 1
  %272 = vperm.xlu0 %271, %v40
  %v273 = vpop.permute.xlu0 %272
  %275 = vset.pattern.permute.xlu0 1
  %276 = vperm.xlu0 %275, %v41
  %v277 = vpop.permute.xlu0 %276
  %279 = vset.pattern.permute.xlu0 1
  %280 = vperm.xlu0 %279, %v42
  %v281 = vpop.permute.xlu0 %280
  %283 = vset.pattern.permute.xlu0 1
  %284 = vperm.xlu0 %283, %v43
  %v285 = vpop.permute.xlu0 %284
  %287 = vset.pattern.permute.xlu0 1
  %288 = vperm.xlu0 %287, %v44
  %v289 = vpop.permute.xlu0 %288
  %291 = vset.pattern.permute.xlu0 1
  %292 = vperm.xlu0 %291, %v45
  %v293 = vpop.permute.xlu0 %292
  %295 = vset.pattern.permute.xlu0 1
  %296 = vperm.xlu0 %295, %v46
  %v297 = vpop.permute.xlu0 %296
  %299 = vset.pattern.permute.xlu0 1
  %300 = vperm.xlu0 %299, %v47
  %v301 = vpop.permute.xlu0 %300
  %303 = vset.pattern.permute.xlu0 1
  %304 = vperm.xlu0 %303, %v48
  %v305 = vpop.permute.xlu0 %304
  %307 = vset.pattern.permute.xlu0 1
  %308 = vperm.xlu0 %307, %v49
  %v309 = vpop.permute.xlu0 %308
  %311 = vset.pattern.permute.xlu0 1
  %312 = vperm.xlu0 %311, %v50
  %v313 = vpop.permute.xlu0 %312
  %315 = vset.pattern.permute.xlu0 1
  %316 = vperm.xlu0 %315, %v51
  %v317 = vpop.permute.xlu0 %316
  %319 = vset.pattern.permute.xlu0 1
  %320 = vperm.xlu0 %319, %v52
  %v321 = vpop.permute.xlu0 %320
  %323 = vset.pattern.permute.xlu0 1
  %324 = vperm.xlu0 %323, %v53
  %v325 = vpop.permute.xlu0 %324
  %327 = vset.pattern.permute.xlu0 1
  %328 = vperm.xlu0 %327, %v54
  %v329 = vpop.permute.xlu0 %328
  %v331 = vlaneseq
  %v332 = vshrl.u32 %v331, 7
  %v333 = vsub.s32 1, %v332
  %v334 = vrot.slane %v22, %v333
  %v335 = vmul.f32 %v269, %v334
  %v336 = vmul.f32 %v273, %v334
  %v337 = vmul.f32 %v277, %v334
  %v338 = vmul.f32 %v281, %v334
  %v339 = vmul.f32 %v285, %v334
  %v340 = vmul.f32 %v289, %v334
  %v341 = vmul.f32 %v293, %v334
  %v342 = vmul.f32 %v297, %v334
  %v343 = vmul.f32 %v301, %v334
  %v344 = vmul.f32 %v305, %v334
  %v345 = vmul.f32 %v309, %v334
  %v346 = vmul.f32 %v313, %v334
  %v347 = vmul.f32 %v317, %v334
  %v348 = vmul.f32 %v321, %v334
  %v349 = vmul.f32 %v325, %v334
  %v350 = vmul.f32 %v329, %v334
  %v351 = vadd.f32 %v251, %v335
  %v352 = vadd.f32 %v252, %v336
  %v353 = vadd.f32 %v253, %v337
  %v354 = vadd.f32 %v254, %v338
  %v355 = vadd.f32 %v255, %v339
  %v356 = vadd.f32 %v256, %v340
  %v357 = vadd.f32 %v257, %v341
  %v358 = vadd.f32 %v258, %v342
  %v359 = vadd.f32 %v259, %v343
  %v360 = vadd.f32 %v260, %v344
  %v361 = vadd.f32 %v261, %v345
  %v362 = vadd.f32 %v262, %v346
  %v363 = vadd.f32 %v263, %v347
  %v364 = vadd.f32 %v264, %v348
  %v365 = vadd.f32 %v265, %v349
  %v366 = vadd.f32 %v266, %v350
  %367 = vset.pattern.permute.xlu0 2
  %368 = vperm.xlu0 %367, %v39
  %v369 = vpop.permute.xlu0 %368
  %371 = vset.pattern.permute.xlu0 2
  %372 = vperm.xlu0 %371, %v40
  %v373 = vpop.permute.xlu0 %372
  %375 = vset.pattern.permute.xlu0 2
  %376 = vperm.xlu0 %375, %v41
  %v377 = vpop.permute.xlu0 %376
  %379 = vset.pattern.permute.xlu0 2
  %380 = vperm.xlu0 %379, %v42
  %v381 = vpop.permute.xlu0 %380
  %383 = vset.pattern.permute.xlu0 2
  %384 = vperm.xlu0 %383, %v43
  %v385 = vpop.permute.xlu0 %384
  %387 = vset.pattern.permute.xlu0 2
  %388 = vperm.xlu0 %387, %v44
  %v389 = vpop.permute.xlu0 %388
  %391 = vset.pattern.permute.xlu0 2
  %392 = vperm.xlu0 %391, %v45
  %v393 = vpop.permute.xlu0 %392
  %395 = vset.pattern.permute.xlu0 2
  %396 = vperm.xlu0 %395, %v46
  %v397 = vpop.permute.xlu0 %396
  %399 = vset.pattern.permute.xlu0 2
  %400 = vperm.xlu0 %399, %v47
  %v401 = vpop.permute.xlu0 %400
  %403 = vset.pattern.permute.xlu0 2
  %404 = vperm.xlu0 %403, %v48
  %v405 = vpop.permute.xlu0 %404
  %407 = vset.pattern.permute.xlu0 2
  %408 = vperm.xlu0 %407, %v49
  %v409 = vpop.permute.xlu0 %408
  %411 = vset.pattern.permute.xlu0 2
  %412 = vperm.xlu0 %411, %v50
  %v413 = vpop.permute.xlu0 %412
  %415 = vset.pattern.permute.xlu0 2
  %416 = vperm.xlu0 %415, %v51
  %v417 = vpop.permute.xlu0 %416
  %419 = vset.pattern.permute.xlu0 2
  %420 = vperm.xlu0 %419, %v52
  %v421 = vpop.permute.xlu0 %420
  %423 = vset.pattern.permute.xlu0 2
  %424 = vperm.xlu0 %423, %v53
  %v425 = vpop.permute.xlu0 %424
  %427 = vset.pattern.permute.xlu0 2
  %428 = vperm.xlu0 %427, %v54
  %v429 = vpop.permute.xlu0 %428
  %v431 = vlaneseq
  %v432 = vshrl.u32 %v431, 7
  %v433 = vsub.s32 2, %v432
  %v434 = vrot.slane %v22, %v433
  %v435 = vmul.f32 %v369, %v434
  %v436 = vmul.f32 %v373, %v434
  %v437 = vmul.f32 %v377, %v434
  %v438 = vmul.f32 %v381, %v434
  %v439 = vmul.f32 %v385, %v434
  %v440 = vmul.f32 %v389, %v434
  %v441 = vmul.f32 %v393, %v434
  %v442 = vmul.f32 %v397, %v434
  %v443 = vmul.f32 %v401, %v434
  %v444 = vmul.f32 %v405, %v434
  %v445 = vmul.f32 %v409, %v434
  %v446 = vmul.f32 %v413, %v434
  %v447 = vmul.f32 %v417, %v434
  %v448 = vmul.f32 %v421, %v434
  %v449 = vmul.f32 %v425, %v434
  %v450 = vmul.f32 %v429, %v434
  %v451 = vadd.f32 %v351, %v435
  %v452 = vadd.f32 %v352, %v436
  %v453 = vadd.f32 %v353, %v437
  %v454 = vadd.f32 %v354, %v438
  %v455 = vadd.f32 %v355, %v439
  %v456 = vadd.f32 %v356, %v440
  %v457 = vadd.f32 %v357, %v441
  %v458 = vadd.f32 %v358, %v442
  %v459 = vadd.f32 %v359, %v443
  %v460 = vadd.f32 %v360, %v444
  %v461 = vadd.f32 %v361, %v445
  %v462 = vadd.f32 %v362, %v446
  %v463 = vadd.f32 %v363, %v447
  %v464 = vadd.f32 %v364, %v448
  %v465 = vadd.f32 %v365, %v449
  %v466 = vadd.f32 %v366, %v450
  %467 = vset.pattern.permute.xlu0 3
  %468 = vperm.xlu0 %467, %v39
  %v469 = vpop.permute.xlu0 %468
  %471 = vset.pattern.permute.xlu0 3
  %472 = vperm.xlu0 %471, %v40
  %v473 = vpop.permute.xlu0 %472
  %475 = vset.pattern.permute.xlu0 3
  %476 = vperm.xlu0 %475, %v41
  %v477 = vpop.permute.xlu0 %476
  %479 = vset.pattern.permute.xlu0 3
  %480 = vperm.xlu0 %479, %v42
  %v481 = vpop.permute.xlu0 %480
  %483 = vset.pattern.permute.xlu0 3
  %484 = vperm.xlu0 %483, %v43
  %v485 = vpop.permute.xlu0 %484
  %487 = vset.pattern.permute.xlu0 3
  %488 = vperm.xlu0 %487, %v44
  %v489 = vpop.permute.xlu0 %488
  %491 = vset.pattern.permute.xlu0 3
  %492 = vperm.xlu0 %491, %v45
  %v493 = vpop.permute.xlu0 %492
  %495 = vset.pattern.permute.xlu0 3
  %496 = vperm.xlu0 %495, %v46
  %v497 = vpop.permute.xlu0 %496
  %499 = vset.pattern.permute.xlu0 3
  %500 = vperm.xlu0 %499, %v47
  %v501 = vpop.permute.xlu0 %500
  %503 = vset.pattern.permute.xlu0 3
  %504 = vperm.xlu0 %503, %v48
  %v505 = vpop.permute.xlu0 %504
  %507 = vset.pattern.permute.xlu0 3
  %508 = vperm.xlu0 %507, %v49
  %v509 = vpop.permute.xlu0 %508
  %511 = vset.pattern.permute.xlu0 3
  %512 = vperm.xlu0 %511, %v50
  %v513 = vpop.permute.xlu0 %512
  %515 = vset.pattern.permute.xlu0 3
  %516 = vperm.xlu0 %515, %v51
  %v517 = vpop.permute.xlu0 %516
  %519 = vset.pattern.permute.xlu0 3
  %520 = vperm.xlu0 %519, %v52
  %v521 = vpop.permute.xlu0 %520
  %523 = vset.pattern.permute.xlu0 3
  %524 = vperm.xlu0 %523, %v53
  %v525 = vpop.permute.xlu0 %524
  %527 = vset.pattern.permute.xlu0 3
  %528 = vperm.xlu0 %527, %v54
  %v529 = vpop.permute.xlu0 %528
  %v531 = vlaneseq
  %v532 = vshrl.u32 %v531, 7
  %v533 = vsub.s32 3, %v532
  %v534 = vrot.slane %v22, %v533
  %v535 = vmul.f32 %v469, %v534
  %v536 = vmul.f32 %v473, %v534
  %v537 = vmul.f32 %v477, %v534
  %v538 = vmul.f32 %v481, %v534
  %v539 = vmul.f32 %v485, %v534
  %v540 = vmul.f32 %v489, %v534
  %v541 = vmul.f32 %v493, %v534
  %v542 = vmul.f32 %v497, %v534
  %v543 = vmul.f32 %v501, %v534
  %v544 = vmul.f32 %v505, %v534
  %v545 = vmul.f32 %v509, %v534
  %v546 = vmul.f32 %v513, %v534
  %v547 = vmul.f32 %v517, %v534
  %v548 = vmul.f32 %v521, %v534
  %v549 = vmul.f32 %v525, %v534
  %v550 = vmul.f32 %v529, %v534
  %v551 = vadd.f32 %v451, %v535
  %v552 = vadd.f32 %v452, %v536
  %v553 = vadd.f32 %v453, %v537
  %v554 = vadd.f32 %v454, %v538
  %v555 = vadd.f32 %v455, %v539
  %v556 = vadd.f32 %v456, %v540
  %v557 = vadd.f32 %v457, %v541
  %v558 = vadd.f32 %v458, %v542
  %v559 = vadd.f32 %v459, %v543
  %v560 = vadd.f32 %v460, %v544
  %v561 = vadd.f32 %v461, %v545
  %v562 = vadd.f32 %v462, %v546
  %v563 = vadd.f32 %v463, %v547
  %v564 = vadd.f32 %v464, %v548
  %v565 = vadd.f32 %v465, %v549
  %v566 = vadd.f32 %v466, %v550
  %v567 = vmax.f32 %v551, 0.0
  %v568 = vmax.f32 %v552, 0.0
  %v569 = vmax.f32 %v553, 0.0
  %v570 = vmax.f32 %v554, 0.0
  %v571 = vmax.f32 %v555, 0.0
  %v572 = vmax.f32 %v556, 0.0
  %v573 = vmax.f32 %v557, 0.0
  %v574 = vmax.f32 %v558, 0.0
  %v575 = vmax.f32 %v559, 0.0
  %v576 = vmax.f32 %v560, 0.0
  %v577 = vmax.f32 %v561, 0.0
  %v578 = vmax.f32 %v562, 0.0
  %v579 = vmax.f32 %v563, 0.0
  %v580 = vmax.f32 %v564, 0.0
  %v581 = vmax.f32 %v565, 0.0
  %v582 = vmax.f32 %v566, 0.0
  %v583 = vld [vmem:[%s3] sm:$0xf]
  %v584 = vpack.c.bf16 %v568, %v567
  %v585 = vpack.c.bf16 %v570, %v569
  %v586 = vpack.c.bf16 %v572, %v571
  %v587 = vpack.c.bf16 %v574, %v573
  %v588 = vpack.c.bf16 %v576, %v575
  %v589 = vpack.c.bf16 %v578, %v577
  %v590 = vpack.c.bf16 %v580, %v579
  %v591 = vpack.c.bf16 %v582, %v581
  %v592 = vld [vmem:[%s4] sm:$0xff]
  %594 = vset.pattern.permute.xlu0 0
  %595 = vperm.xlu0 %594, %v592
  %v596 = vpop.permute.xlu0 %595
  %598 = vmatprep.subr.bf16.mxu0 0
  %599 = vmatpush1.bf16.msra.mxu0 %v584
  %600 = vmatprep.subr.bf16.mxu0 0
  %601 = vmatpush1.bf16.msra.mxu0 %v585
  %602 = vmatprep.subr.bf16.mxu0 0
  %603 = vmatpush1.bf16.msra.mxu0 %v586
  %604 = vmatprep.subr.bf16.mxu0 0
  %605 = vmatpush1.bf16.msra.mxu0 %v587
  %606 = vmatprep.subr.bf16.mxu0 0
  %607 = vmatpush1.bf16.msra.mxu0 %v588
  %608 = vmatprep.subr.bf16.mxu0 0
  %609 = vmatpush1.bf16.msra.mxu0 %v589
  %610 = vmatprep.subr.bf16.mxu0 0
  %611 = vmatpush1.bf16.msra.mxu0 %v590
  %612 = vmatprep.subr.bf16.mxu0 0
  %613 = vmatpush1.bf16.msra.mxu0 %v591
  %614 = vmatprep.subr.bf16.mxu0 0
  %615 = vmatpush1.bf16.msra.mxu0 0
  %616 = vmatprep.subr.bf16.mxu0 0
  %617 = vmatpush1.bf16.msra.mxu0 0
  %618 = vmatprep.subr.bf16.mxu0 0
  %619 = vmatpush1.bf16.msra.mxu0 0
  %620 = vmatprep.subr.bf16.mxu0 0
  %621 = vmatpush1.bf16.msra.mxu0 0
  %622 = vmatprep.subr.bf16.mxu0 0
  %623 = vmatpush1.bf16.msra.mxu0 0
  %624 = vmatprep.subr.bf16.mxu0 0
  %625 = vmatpush1.bf16.msra.mxu0 0
  %626 = vmatprep.subr.bf16.mxu0 0
  %627 = vmatpush1.bf16.msra.mxu0 0
  %628 = vmatprep.subr.bf16.mxu0 0
  %629 = vmatpush1.bf16.msra.mxu0 0
  %630 = vmatprep.mubr.bf16.mxu0 0
  %631 = vmatmul.mubr.bf16.gmra.mrb[0].mxu0 %v583
  %v632 = vpop.f32.mrb[0].mxu0
  %v633 = vadd.f32 %v596, %v632
  %v634 = vpop.f32.mrb[0].mxu0
  %v635 = vpop.f32.mrb[0].mxu0
  %v636 = vpop.f32.mrb[0].mxu0
  %637 = vdwg.mxu0
  %638 = vst [vmem:[%s5] sm:$0xff] %v633
  // Predicated region
  $region22: #{irisnet_forward.1} parent=0 // pred_check
    _
  $region23: #{irisnet_forward.1} parent=0 // pred_check_branch
    %640 = sbr.rel (0) target = $region25
  $region24: #{irisnet_forward.1} parent=0 // pred_region
    _
  $region25: #{irisnet_forward.1} parent=0 // pred_fallthru
    _
  // Predicated region
  $region26: #{irisnet_forward.1} parent=0 // pred_check
    _
  $region27: #{irisnet_forward.1} parent=0 // pred_check_branch
    %642 = sbr.rel (0) target = $region29
  $region28: #{irisnet_forward.1} parent=0 // pred_region
    _
  $region29: #{irisnet_forward.1} parent=0 // pred_fallthru
    _

</llo_original>
